<compile_context>
chip_gen: v6e
topology: v6e:2x2x1
jax: 0.10.0
libtpu: 0.0.40
codegen_flags: <defaults>
</compile_context>

<pallas_src>
import jax
import jax.numpy as jnp
from jax import lax
from jax.experimental import pallas as pl
from jax.experimental.pallas import tpu as pltpu


def _nconv_kernel(a_ref, x_ref, o_ref):
    # a_ref: (V, W), x_ref: (V, Mt), o_ref: (W, Mt)
    # out[w, m] = sum_v a[v, w] * x[v, m]
    o_ref[...] = lax.dot_general(
        a_ref[...], x_ref[...],
        dimension_numbers=(((0,), (0,)), ((), ())),
        preferred_element_type=jnp.float32,
    ).astype(o_ref.dtype)


def _tile_and_pad(m, m_tile):
    """Choose a lane-dense tile for the flattened last dim.

    Returns (tile, padded_m) with padded_m % tile == 0 and padded_m a
    multiple of 128 (dense, unmasked stores).
    """
    mp = ((m + 127) // 128) * 128
    if mp <= m_tile:
        return mp, mp
    mp = ((mp + m_tile - 1) // m_tile) * m_tile
    return m_tile, mp


def nconv(x, A, dims, *, m_tile=2048):
    """Pallas implementation of DFDGCN's nconv forward pass.

    x: (N, C, V, L).  A: (V, W) if dims == 2, (N, V, W) if dims == 3.
    Returns (N, C, W, L) in x.dtype.
    """
    N, C, V, L = x.shape
    dtype = x.dtype
    itemsize = jnp.dtype(dtype).itemsize
    assert m_tile % 128 == 0, "m_tile must be a multiple of the 128-lane width"

    # Conservative scoped-VMEM limit valid on v5e/v6e/v7x; tiles here are << this.
    cparams_kw = dict(vmem_limit_bytes=32 * 1024 * 1024)

    if dims == 2:
        Va, W = A.shape
        assert Va == V
        M = N * C * L
        Mt, Mp = _tile_and_pad(M, m_tile)
        # (N, C, V, L) -> (V, N, C, L) -> (V, M): contraction dim on sublanes,
        # large flattened M on lanes.
        xf = jnp.transpose(x, (2, 0, 1, 3)).reshape(V, M)
        if Mp != M:
            xf = jnp.pad(xf, ((0, 0), (0, Mp - M)))

        out = pl.pallas_call(
            _nconv_kernel,
            out_shape=jax.ShapeDtypeStruct((W, Mp), dtype),
            grid=(Mp // Mt,),
            in_specs=[
                pl.BlockSpec((V, W), lambda m: (0, 0)),    # A resident across grid
                pl.BlockSpec((V, Mt), lambda m: (0, m)),
            ],
            out_specs=pl.BlockSpec((W, Mt), lambda m: (0, m)),
            compiler_params=pltpu.CompilerParams(
                dimension_semantics=("parallel",), **cparams_kw),
            cost_estimate=pl.CostEstimate(
                flops=2 * N * C * V * W * L,
                transcendentals=0,
                bytes_accessed=(N * C * V * L + V * W + N * C * W * L) * itemsize,
            ),
        )(A, xf)

        # (W, Mp) -> (W, M) -> (W, N, C, L) -> (N, C, W, L)
        out = out[:, :M].reshape(W, N, C, L)
        return jnp.transpose(out, (1, 2, 0, 3))

    elif dims == 3:
        Na, Va, W = A.shape
        assert Na == N and Va == V
        M = C * L
        Mt, Mp = _tile_and_pad(M, m_tile)
        # (N, C, V, L) -> (N, V, C, L) -> (N, V, M)
        xf = jnp.transpose(x, (0, 2, 1, 3)).reshape(N, V, M)
        if Mp != M:
            xf = jnp.pad(xf, ((0, 0), (0, 0), (0, Mp - M)))

        out = pl.pallas_call(
            _nconv_kernel,
            out_shape=jax.ShapeDtypeStruct((N, W, Mp), dtype),
            grid=(N, Mp // Mt),   # n outer so A[n] stays resident across M tiles
            in_specs=[
                pl.BlockSpec((pl.Squeezed(), V, W), lambda n, m: (n, 0, 0)),
                pl.BlockSpec((pl.Squeezed(), V, Mt), lambda n, m: (n, 0, m)),
            ],
            out_specs=pl.BlockSpec((pl.Squeezed(), W, Mt), lambda n, m: (n, 0, m)),
            compiler_params=pltpu.CompilerParams(
                dimension_semantics=("parallel", "parallel"), **cparams_kw),
            cost_estimate=pl.CostEstimate(
                flops=2 * N * C * V * W * L,
                transcendentals=0,
                bytes_accessed=(N * C * V * L + N * V * W + N * C * W * L) * itemsize,
            ),
        )(A, xf)

        # (N, W, Mp) -> (N, W, M) -> (N, W, C, L) -> (N, C, W, L)
        out = out[:, :, :M].reshape(N, W, C, L)
        return jnp.transpose(out, (0, 2, 1, 3))

    else:
        raise NotImplementedError(
            'GConv not implement for adj of dimension ' + str(dims))


if __name__ == "__main__":
    key = jax.random.PRNGKey(0)
    k_x, k_a2, k_a3, k_x2, k_b2, k_b3 = jax.random.split(key, 6)

    # Small shapes consistent with the module.
    N, C, V, L, W = 2, 4, 16, 16, 16
    x = jax.random.normal(k_x, (N, C, V, L), dtype=jnp.float32)
    A2 = jax.random.normal(k_a2, (V, W), dtype=jnp.float32)       # dims == 2 adjacency
    A3 = jax.random.normal(k_a3, (N, V, W), dtype=jnp.float32)    # dims == 3 adjacency

    out2 = jax.block_until_ready(nconv(x, A2, dims=2))
    out3 = jax.block_until_ready(nconv(x, A3, dims=3))

    ref2 = jnp.einsum('ncvl,vw->ncwl', x, A2)
    ref3 = jnp.einsum('ncvl,nvw->ncwl', x, A3)

    assert out2.shape == (N, C, W, L) and out3.shape == (N, C, W, L)
    assert jnp.allclose(out2, ref2, atol=1e-4, rtol=1e-4)
    assert jnp.allclose(out3, ref3, atol=1e-4, rtol=1e-4)

    # Odd, non-(8,128)-aligned shapes exercising the padded + multi-tile path.
    N2, C2, V2, L2, W2 = 2, 6, 10, 24, 14
    xb = jax.random.normal(k_x2, (N2, C2, V2, L2), dtype=jnp.float32)
    B2 = jax.random.normal(k_b2, (V2, W2), dtype=jnp.float32)
    B3 = jax.random.normal(k_b3, (N2, V2, W2), dtype=jnp.float32)

    outb2 = jax.block_until_ready(nconv(xb, B2, dims=2, m_tile=128))
    outb3 = jax.block_until_ready(nconv(xb, B3, dims=3, m_tile=128))

    refb2 = jnp.einsum('ncvl,vw->ncwl', xb, B2)
    refb3 = jnp.einsum('ncvl,nvw->ncwl', xb, B3)

    assert jnp.allclose(outb2, refb2, atol=1e-4, rtol=1e-4)
    assert jnp.allclose(outb3, refb3, atol=1e-4, rtol=1e-4)

    print("KERNEL_OK")
</pallas_src>

<mosaic_0001>
module attributes {stable_mosaic.version = 11 : i64} {
  func.func @_nconv_kernel(%arg0: i32, %arg1: memref<16x16xf32, #tpu.memory_space<vmem>>, %arg2: memref<16x128xf32, #tpu.memory_space<vmem>>, %arg3: memref<16x128xf32, #tpu.memory_space<vmem>>) attributes {dimension_semantics = [#tpu.dimension_semantics<parallel>], iteration_bounds = array<i64: 1>, scalar_prefetch = 0 : i64, scratch_operands = 0 : i64, tpu.core_type = #tpu.core_type<tc>, window_params = [{pipeline_mode = #tpu.pipeline_mode<synchronous>, transform_indices = @transform_0, window_bounds = array<i64: 16, 16>}, {transform_indices = @transform_1, window_bounds = array<i64: 16, 128>}, {transform_indices = @transform_2, window_bounds = array<i64: 16, 128>}]} {
    %c0 = arith.constant 0 : index
    %c0_0 = arith.constant 0 : index
    %0 = vector.load %arg1[%c0, %c0_0] : memref<16x16xf32, #tpu.memory_space<vmem>>, vector<16x16xf32>
    %c0_1 = arith.constant 0 : index
    %c0_2 = arith.constant 0 : index
    %1 = vector.load %arg2[%c0_1, %c0_2] : memref<16x128xf32, #tpu.memory_space<vmem>>, vector<16x128xf32>
    %cst = arith.constant dense<0.000000e+00> : vector<16x128xf32>
    %2 = tpu.matmul %0, %1, %cst {dimension_numbers = #tpu.dot_dimension_numbers<[0], [0], [1], [1], [0, 1, 1, 1], [], []>} : vector<16x16xf32>, vector<16x128xf32>, vector<16x128xf32> -> vector<16x128xf32>
    %c0_3 = arith.constant 0 : index
    %c0_4 = arith.constant 0 : index
    %3 = vector.load %arg3[%c0_3, %c0_4] : memref<16x128xf32, #tpu.memory_space<vmem>>, vector<16x128xf32>
    tpu.vector_store %arg3[%c0_3, %c0_4], %2 {strides = array<i32>} : memref<16x128xf32, #tpu.memory_space<vmem>>, vector<16x128xf32>,
    return
  }
  func.func @transform_0(%arg0: i32) -> (i32, i32) {
    %c0_i32 = arith.constant 0 : i32
    %c0_i32_0 = arith.constant 0 : i32
    %c0_i32_1 = arith.constant 0 : i32
    return %c0_i32, %c0_i32_0 : i32, i32
  }
  func.func @transform_1(%arg0: i32) -> (i32, i32) {
    %c0_i32 = arith.constant 0 : i32
    %c0_i32_0 = arith.constant 0 : i32
    return %c0_i32, %arg0 : i32, i32
  }
  func.func @transform_2(%arg0: i32) -> (i32, i32) {
    %c0_i32 = arith.constant 0 : i32
    %c0_i32_0 = arith.constant 0 : i32
    return %c0_i32, %arg0 : i32, i32
  }
}

</mosaic_0001>

<llo_original>
// kernel: tpu_custom_call.1
$region0: #{tpu_custom_call.1}
  #allocation0 [shape = 'u32[]', space=smem, size = 0x4, offset = 0x4, fixed_abs, tag = 'smem constant byte address 0x4 - core index']
  #allocation1 [shape = 'u32[144,128]{1,0:T(1,128)}', space=vmem, size = 0x12000, scoped, tag = 'internal scratch']
  %s0 = inlined_call_operand.hbm [shape: f32[16,16], index: 0, kind: input, shape index: {}]
  %s1 = inlined_call_operand.hbm [shape: f32[16,128], index: 1, kind: input, shape index: {}]
  %s2 = inlined_call_operand.hbm [shape: f32[16,128], index: 2, kind: output, shape index: {}]
  %s3 = sld [smem:[#allocation0]]
  $region26: #{tpu_custom_call.1} parent=0
    _
  %s5 = ssub.s32 1, %s3
  %s6 = scalar_select 0, %s5, %s3
  $region1: #{tpu_custom_call.1} parent=0
    #allocation2 [shape = 'u8[8192]{0}', space=vmem, size = 0x2000, scoped, tag = 'input window, operand 0, single buffered']
    #allocation3 [shape = 's32[1]{0}', space=sflag, size = 0x4, scoped, tag = 'scoped memory for tpu_custom_call.1']
    #allocation4 [shape = 's32[1]{0}', space=sflag, size = 0x4, scoped, tag = 'scoped memory for tpu_custom_call.1']
    #allocation5 [shape = 'u8[8192]{0}', space=vmem, size = 0x2000, scoped, tag = 'input window, operand 1, single buffered']
    #allocation6 [shape = 's32[1]{0}', space=sflag, size = 0x4, scoped, tag = 'scoped memory for tpu_custom_call.1']
    #allocation7 [shape = 'u8[8192]{0}', space=vmem, size = 0x2000, scoped, tag = 'output window, operand 0, single buffered']
    %7 = vsyncpa [#allocation3], 0
    %8 = vsyncpa [#allocation6], 0
    %9 = vsyncpa [#allocation4], 0
    // Predicated region
    $region2: #{tpu_custom_call.1} parent=1 // pred_check
      _
    $region3: #{tpu_custom_call.1} parent=1 // pred_check_branch
      %11 = sbr.rel (0) target = $region5
    $region4: #{tpu_custom_call.1} parent=1 // pred_region
      %s13 = ssub.s32 256, 256
      %14 = vsyncadd [#allocation3], %s13
      %s15 = sshll.u32 [#allocation2], 4
      %s16 = int_to_ptr.vmem [resolvable:$true] %s15
      %21 = dma.hbm_to_vmem [thread:$0]  %s0, 256, %s16, [#allocation3], 128, 128, 8
    $region5: #{tpu_custom_call.1} parent=1 // pred_fallthru
      _
    // Predicated region
    $region6: #{tpu_custom_call.1} parent=1 // pred_check
      _
    $region7: #{tpu_custom_call.1} parent=1 // pred_check_branch
      %23 = sbr.rel (0) target = $region9
    $region8: #{tpu_custom_call.1} parent=1 // pred_region
      %s25 = ssub.s32 256, 256
      %26 = vsyncadd [#allocation6], %s25
      %s27 = sshll.u32 [#allocation5], 4
      %s28 = int_to_ptr.vmem [resolvable:$true] %s27
      %33 = dma.hbm_to_vmem [thread:$0]  %s1, 256, %s28, [#allocation6], 128, 128, 8
    $region9: #{tpu_custom_call.1} parent=1 // pred_fallthru
      _
    // Predicated region
    $region10: #{tpu_custom_call.1} parent=1 // pred_check
      _
    $region11: #{tpu_custom_call.1} parent=1 // pred_check_branch
      %35 = sbr.rel (0) target = $region13
    $region12: #{tpu_custom_call.1} parent=1 // pred_region
      %36 = dma.done [#allocation3], 256
    $region13: #{tpu_custom_call.1} parent=1 // pred_fallthru
      _
    // Predicated region
    $region14: #{tpu_custom_call.1} parent=1 // pred_check
      _
    $region15: #{tpu_custom_call.1} parent=1 // pred_check_branch
      %38 = sbr.rel (0) target = $region17
    $region16: #{tpu_custom_call.1} parent=1 // pred_region
      %39 = dma.done [#allocation6], 256
    $region17: #{tpu_custom_call.1} parent=1 // pred_fallthru
      _
    %v40 = vld [vmem:[#allocation2] sm:$0xff]
    %v41 = vld [vmem:[#allocation2 + $0x8] sm:$0xff]
    %v42 = vld [vmem:[#allocation5] sm:$0xff]
    %v43 = vld [vmem:[#allocation5 + $0x8] sm:$0xff]
    %44 = vxpose.xlu0.b32.start [1/16] %v40, 128
    %45 = vxpose.xlu0.b32.cont [2/16] %v41, 128
    %46 = vxpose.xlu0.b32.cont [3/16] 0.0, 128
    %47 = vxpose.xlu0.b32.cont [4/16] 0.0, 128
    %48 = vxpose.xlu0.b32.cont [5/16] 0.0, 128
    %49 = vxpose.xlu0.b32.cont [6/16] 0.0, 128
    %50 = vxpose.xlu0.b32.cont [7/16] 0.0, 128
    %51 = vxpose.xlu0.b32.cont [8/16] 0.0, 128
    %52 = vxpose.xlu0.b32.cont [9/16] 0.0, 128
    %53 = vxpose.xlu0.b32.cont [10/16] 0.0, 128
    %54 = vxpose.xlu0.b32.cont [11/16] 0.0, 128
    %55 = vxpose.xlu0.b32.cont [12/16] 0.0, 128
    %56 = vxpose.xlu0.b32.cont [13/16] 0.0, 128
    %57 = vxpose.xlu0.b32.cont [14/16] 0.0, 128
    %58 = vxpose.xlu0.b32.cont [15/16] 0.0, 128
    %59 = vxpose.xlu0.b32.end [16/16] 0.0, 128
    %v60 = vpop.trf.xlu0
    %v61 = vpop.trf.xlu0
    %v62 = vpop.trf.xlu0
    %v63 = vpop.trf.xlu0
    %v64 = vpop.trf.xlu0
    %v65 = vpop.trf.xlu0
    %v66 = vpop.trf.xlu0
    %v67 = vpop.trf.xlu0
    %v68 = vpop.trf.xlu0
    %v69 = vpop.trf.xlu0
    %v70 = vpop.trf.xlu0
    %v71 = vpop.trf.xlu0
    %v72 = vpop.trf.xlu0
    %v73 = vpop.trf.xlu0
    %v74 = vpop.trf.xlu0
    %v75 = vpop.trf.xlu0
    %vm76 = vcmask 130048
    %v78 = vsel %vm76, %v60, 0
    %v81 = vsel %vm76, %v61, 0
    %83 = vmatprep.subr.mxu0 0.0
    %84 = vmatpush1.msra.mxu0 0.0
    %85 = vmatprep.subr.mxu0 0.0
    %86 = vmatpush1.msra.mxu0 0.0
    %87 = vmatprep.subr.mxu0 0.0
    %88 = vmatpush1.msra.mxu0 0.0
    %89 = vmatprep.subr.mxu0 0.0
    %90 = vmatpush1.msra.mxu0 0.0
    %91 = vmatprep.subr.mxu0 0.0
    %92 = vmatpush1.msra.mxu0 0.0
    %93 = vmatprep.subr.mxu0 0.0
    %94 = vmatpush1.msra.mxu0 0.0
    %95 = vmatprep.subr.mxu0 0.0
    %96 = vmatpush1.msra.mxu0 0.0
    %97 = vmatprep.subr.mxu0 0.0
    %98 = vmatpush1.msra.mxu0 0.0
    %99 = vmatprep.subr.mxu0 0.0
    %100 = vmatpush1.msra.mxu0 0.0
    %101 = vmatprep.subr.mxu0 0.0
    %102 = vmatpush1.msra.mxu0 0.0
    %103 = vmatprep.subr.mxu0 0.0
    %104 = vmatpush1.msra.mxu0 0.0
    %105 = vmatprep.subr.mxu0 0.0
    %106 = vmatpush1.msra.mxu0 0.0
    %107 = vmatprep.subr.mxu0 0.0
    %108 = vmatpush1.msra.mxu0 0.0
    %109 = vmatprep.subr.mxu0 0.0
    %110 = vmatpush1.msra.mxu0 0.0
    %111 = vmatprep.subr.mxu0 0.0
    %112 = vmatpush1.msra.mxu0 %v43
    %113 = vmatprep.subr.mxu0 0.0
    %114 = vmatpush1.msra.mxu0 %v42
    %115 = vmatprep.subr.mxu0 0.0
    %116 = vmatpush2.msra.mxu0 0.0
    %117 = vmatprep.subr.mxu0 0.0
    %118 = vmatpush2.msra.mxu0 0.0
    %119 = vmatprep.subr.mxu0 0.0
    %120 = vmatpush2.msra.mxu0 0.0
    %121 = vmatprep.subr.mxu0 0.0
    %122 = vmatpush2.msra.mxu0 0.0
    %123 = vmatprep.subr.mxu0 0.0
    %124 = vmatpush2.msra.mxu0 0.0
    %125 = vmatprep.subr.mxu0 0.0
    %126 = vmatpush2.msra.mxu0 0.0
    %127 = vmatprep.subr.mxu0 0.0
    %128 = vmatpush2.msra.mxu0 0.0
    %129 = vmatprep.subr.mxu0 0.0
    %130 = vmatpush2.msra.mxu0 0.0
    %131 = vmatprep.subr.mxu0 0.0
    %132 = vmatpush2.msra.mxu0 0.0
    %133 = vmatprep.subr.mxu0 0.0
    %134 = vmatpush2.msra.mxu0 0.0
    %135 = vmatprep.subr.mxu0 0.0
    %136 = vmatpush2.msra.mxu0 0.0
    %137 = vmatprep.subr.mxu0 0.0
    %138 = vmatpush2.msra.mxu0 0.0
    %139 = vmatprep.subr.mxu0 0.0
    %140 = vmatpush2.msra.mxu0 0.0
    %141 = vmatprep.subr.mxu0 0.0
    %142 = vmatpush2.msra.mxu0 0.0
    %143 = vmatprep.subr.mxu0 0.0
    %144 = vmatpush2.msra.mxu0 0.0
    %145 = vmatprep.subr.mxu0 0.0
    %146 = vmatpush2.msra.mxu0 0.0
    %147 = vmatprep.mubr.f32.mxu0 0.0
    %148 = vmatmul.mubr.f32.gmra.mxu0 %v78
    %v149 = vpop.f32.mrf.mxu0
    %v150 = vadd.f32 0.0, %v149
    %v151 = vpop.f32.mrf.mxu0
    %152 = vmatprep.mubr.f32.mxu0 0.0
    %153 = vmatmul.mubr.f32.gmra.mxu0 %v81
    %v154 = vpop.f32.mrf.mxu0
    %v155 = vadd.f32 0.0, %v154
    %v156 = vpop.f32.mrf.mxu0
    %157 = vdwg.mxu0
    %158 = vst [vmem:[#allocation7] sm:$0xff] %v150
    %159 = vst [vmem:[#allocation7 + $0x8] sm:$0xff] %v155
    // Predicated region
    $region18: #{tpu_custom_call.1} parent=1 // pred_check
      _
    $region19: #{tpu_custom_call.1} parent=1 // pred_check_branch
      %161 = sbr.rel (0) target = $region21
    $region20: #{tpu_custom_call.1} parent=1 // pred_region
      %s163 = ssub.s32 256, 256
      %164 = vsyncadd [#allocation4], %s163
      %s165 = sshll.u32 [#allocation7], 4
      %s166 = int_to_ptr.vmem [resolvable:$true] %s165
      %171 = dma.vmem_to_hbm [thread:$0]  %s166, 256, %s2, [#allocation4], 128, 128, 8
    $region21: #{tpu_custom_call.1} parent=1 // pred_fallthru
      _
    // Predicated region
    $region22: #{tpu_custom_call.1} parent=1 // pred_check
      _
    $region23: #{tpu_custom_call.1} parent=1 // pred_check_branch
      %173 = sbr.rel (0) target = $region25
    $region24: #{tpu_custom_call.1} parent=1 // pred_region
      %174 = dma.done [#allocation4], 256
    $region25: #{tpu_custom_call.1} parent=1 // pred_fallthru
      _
    %175 = vsyncpa [#allocation3], 1
    %176 = vsyncpa [#allocation6], 1
    %177 = vsyncpa [#allocation4], 1

</llo_original>
